<compile_context>
chip_gen: v5e
topology: v5e:2x2
jax: 0.10.0
libtpu: 0.0.40
codegen_flags: <defaults>
</compile_context>

<pallas_src>
import jax
import jax.numpy as jnp
from jax.experimental import pallas as pl
from jax.experimental.pallas import tpu as pltpu


# ---------------------------------------------------------------------------
# Kernels
# ---------------------------------------------------------------------------

def _bilinear_kernel_folded(hd_ref, hm_ref, wblk_ref, sel_ref, o_ref):
    """Lane-folded path (feature dim folded into full 128-lane rows).

    hd_ref, hm_ref : (TMF, 128) tiles, r = 128 // F original rows per vreg row.
    wblk_ref       : (128, 128) resident block-diagonal kron(I_r, W).
    sel_ref        : (128, r) resident 0/1 group selector (f32).
    o_ref          : (TMF, r) f32; row-major flatten gives the final output.
    """
    hd0 = jnp.dot(hd_ref[...], wblk_ref[...],
                  preferred_element_type=jnp.float32)           # MXU, K = 128
    prod = hd0 * hm_ref[...].astype(jnp.float32)                # VPU
    grp = jnp.dot(prod, sel_ref[...],
                  preferred_element_type=jnp.float32)           # per-group sums
    o_ref[...] = jax.nn.sigmoid(grp).astype(o_ref.dtype)        # EUP


def _bilinear_kernel_plain(hd_ref, hm_ref, w_ref, o_ref):
    """Fallback path for feature sizes that do not divide 128."""
    hd0 = jnp.dot(hd_ref[...], w_ref[...], preferred_element_type=jnp.float32)
    prod = hd0 * hm_ref[...].astype(jnp.float32)
    o_ref[...] = jax.nn.sigmoid(jnp.sum(prod, axis=1)).astype(o_ref.dtype)


# ---------------------------------------------------------------------------
# Tile sizing / VMEM accounting (per TPU generation)
# ---------------------------------------------------------------------------

def _vmem_capacity_bytes():
    try:
        return int(pltpu.get_tpu_info().vmem_capacity_bytes)
    except Exception:
        return 64 << 20   # conservative default = v7x physical VMEM per TC


def _vmem_limit_bytes(bytes_needed):
    cap = _vmem_capacity_bytes()
    return int(min(cap - (4 << 20), max(32 << 20, bytes_needed + (8 << 20))))


def _choose_rows(n_rows, per_row_bytes, granule):
    """Largest row tile whose pipelined VMEM footprint fits this chip."""
    cap = _vmem_capacity_bytes()
    budget = min(int(cap * 0.75), 96 << 20)   # ~96 MiB on v5e/v6e, ~48 MiB on v7x
    rows = budget // max(per_row_bytes, 1)
    if rows >= n_rows:
        return n_rows                          # single full-array tile
    rows = max(granule, (rows // granule) * granule)
    if rows >= n_rows:
        return n_rows
    steps = pl.cdiv(n_rows, rows)
    # Nudge to an even step count so the "parallel" axis splits evenly across
    # v7x's two TensorCores (harmless on single-core v5e/v6e).
    if steps % 2 == 1:
        cand = pl.cdiv(pl.cdiv(n_rows, steps + 1), granule) * granule
        if cand >= granule and pl.cdiv(n_rows, cand) % 2 == 0:
            rows = cand
    return rows


# ---------------------------------------------------------------------------
# Wrappers
# ---------------------------------------------------------------------------

def _bilinear_decoder_folded(h_diseases, h_mirnas, W, r, tm):
    N, F = h_diseases.shape
    in_dtype = h_diseases.dtype
    itemsize = jnp.dtype(in_dtype).itemsize
    nf = N // r                                    # folded row count

    # Free row-major views: r original rows per 128-lane row.
    hd_f = h_diseases.reshape(nf, 128)
    hm_f = h_mirnas.reshape(nf, 128)

    # Block-diagonal W applies the (F, F) bilinear form per 1/r lane group;
    # the 0/1 selector turns per-group lane sums into the (nf, r) output.
    w_blk = jnp.kron(jnp.eye(r, dtype=W.dtype), W).astype(in_dtype)       # (128,128)
    sel = (jnp.arange(128, dtype=jnp.int32)[:, None] // F
           == jnp.arange(r, dtype=jnp.int32)[None, :]).astype(jnp.float32)  # (128,r)

    # VMEM accounting on lane-padded widths (the r-wide output pads to 128).
    per_row = (2 * 2 * 128 * itemsize      # hd/hm tiles, double buffered
               + 2 * 128 * 4               # f32 matmul result + product scratch
               + 2 * 128 * 4)              # f32 output block, double buffered
    if tm is None:
        tmf = _choose_rows(nf, per_row, 8)
    else:
        tmf = min(max(1, tm // r), nf)
        if tmf < nf:
            tmf = max(8, (tmf // 8) * 8)

    grid = (pl.cdiv(nf, tmf),)             # no padding: tail block is masked
    resident = 128 * 128 * itemsize + 128 * 128 * 4
    vmem_limit = _vmem_limit_bytes(per_row * tmf + resident)

    out2d = pl.pallas_call(
        _bilinear_kernel_folded,
        out_shape=jax.ShapeDtypeStruct((nf, r), jnp.float32),
        grid_spec=pltpu.PrefetchScalarGridSpec(
            num_scalar_prefetch=0,
            grid=grid,
            in_specs=[
                pl.BlockSpec((tmf, 128), lambda i: (i, 0)),      # folded h_diseases
                pl.BlockSpec((tmf, 128), lambda i: (i, 0)),      # folded h_mirnas
                pl.BlockSpec((128, 128), lambda i: (0, 0),
                             pipeline_mode=pl.Buffered(1)),      # resident W block
                pl.BlockSpec((128, r), lambda i: (0, 0),
                             pipeline_mode=pl.Buffered(1)),      # resident selector
            ],
            out_specs=pl.BlockSpec((tmf, r), lambda i: (i, 0)),
        ),
        compiler_params=pltpu.CompilerParams(
            dimension_semantics=("parallel",),
            vmem_limit_bytes=vmem_limit,
        ),
        cost_estimate=pl.CostEstimate(
            flops=2 * N * F * F + 2 * N * F + 2 * nf * 128 * r,
            transcendentals=N,
            bytes_accessed=2 * N * F * itemsize + 128 * 128 * itemsize + N * 4,
        ),
    )(hd_f, hm_f, w_blk, sel)

    return out2d.reshape(N)                # contiguous row-major -> free reshape


def _bilinear_decoder_plain(h_diseases, h_mirnas, W, tm):
    N, F = h_diseases.shape
    in_dtype = h_diseases.dtype
    itemsize = jnp.dtype(in_dtype).itemsize
    w_itemsize = jnp.dtype(W.dtype).itemsize

    lane_w = pl.cdiv(F, 128) * 128                   # VMEM lane padding of F
    per_row = (2 * 2 * lane_w * itemsize             # hd/hm tiles, double buffered
               + 2 * lane_w * 4                      # f32 matmul result + product
               + 2 * 4)                              # f32 1-D output
    if tm is None:
        tm_rows = _choose_rows(N, per_row, 128)
    else:
        tm_rows = min(tm, N)
        if tm_rows < N:
            tm_rows = max(128, (tm_rows // 128) * 128)

    grid = (pl.cdiv(N, tm_rows),)                    # no padding: tail masked
    resident = pl.cdiv(F, 8) * 8 * lane_w * w_itemsize
    vmem_limit = _vmem_limit_bytes(per_row * tm_rows + resident)

    W = W.astype(in_dtype)

    return pl.pallas_call(
        _bilinear_kernel_plain,
        out_shape=jax.ShapeDtypeStruct((N,), jnp.float32),
        grid_spec=pltpu.PrefetchScalarGridSpec(
            num_scalar_prefetch=0,
            grid=grid,
            in_specs=[
                pl.BlockSpec((tm_rows, F), lambda i: (i, 0)),    # h_diseases tile
                pl.BlockSpec((tm_rows, F), lambda i: (i, 0)),    # h_mirnas tile
                pl.BlockSpec((F, F), lambda i: (0, 0),
                             pipeline_mode=pl.Buffered(1)),      # resident W
            ],
            out_specs=pl.BlockSpec((tm_rows,), lambda i: (i,)),  # lane-dense rows
        ),
        compiler_params=pltpu.CompilerParams(
            dimension_semantics=("parallel",),
            vmem_limit_bytes=vmem_limit,
        ),
        cost_estimate=pl.CostEstimate(
            flops=2 * N * F * F + 2 * N * F,
            transcendentals=N,
            bytes_accessed=2 * N * F * itemsize + F * F * w_itemsize + N * 4,
        ),
    )(h_diseases, h_mirnas, W)


def bilinear_decoder(h_diseases, h_mirnas, W, *, tm=None):
    """sigmoid(sum((h_diseases @ W) * h_mirnas, axis=1)) -> (N,) float32."""
    N, F = h_diseases.shape
    assert h_mirnas.shape == (N, F)
    assert W.shape == (F, F)

    fold = 128 // F if (F < 128 and 128 % F == 0) else 1
    if fold > 1 and N % fold == 0:
        return _bilinear_decoder_folded(h_diseases, h_mirnas, W, fold, tm)
    return _bilinear_decoder_plain(h_diseases, h_mirnas, W, tm)


def bilinear_decoder_ref(h_diseases, h_mirnas, W):
    hd = h_diseases.astype(jnp.float32)
    hm = h_mirnas.astype(jnp.float32)
    w = W.astype(jnp.float32)
    h0 = jnp.sum((hd @ w) * hm, axis=1)
    return jax.nn.sigmoid(h0)


if __name__ == "__main__":
    key = jax.random.PRNGKey(0)
    k_w, k_d, k_m = jax.random.split(key, 3)

    feature_size = 32
    n_pairs = 8

    # Deterministic "parameter" matching nn.Parameter(torch.randn(F, F)).
    W = jax.random.normal(k_w, (feature_size, feature_size), dtype=jnp.float32)
    h_diseases = jax.random.normal(k_d, (n_pairs, feature_size), dtype=jnp.float32)
    h_mirnas = jax.random.normal(k_m, (n_pairs, feature_size), dtype=jnp.float32)

    # f32, lane-folded path (F=32 -> 4 rows per 128-lane vreg).
    out = jax.block_until_ready(bilinear_decoder(h_diseases, h_mirnas, W))
    ref = bilinear_decoder_ref(h_diseases, h_mirnas, W)
    assert out.shape == (n_pairs,)
    assert jnp.allclose(out, ref, atol=1e-4, rtol=1e-4)

    # bf16 production path (same folded kernel, f32 accumulation inside).
    out_bf16 = jax.block_until_ready(
        bilinear_decoder(h_diseases.astype(jnp.bfloat16),
                         h_mirnas.astype(jnp.bfloat16),
                         W.astype(jnp.bfloat16)))
    ref_bf16 = bilinear_decoder_ref(h_diseases.astype(jnp.bfloat16),
                                    h_mirnas.astype(jnp.bfloat16),
                                    W.astype(jnp.bfloat16))
    assert out_bf16.shape == (n_pairs,)
    assert jnp.allclose(out_bf16, ref_bf16, atol=2e-2, rtol=2e-2)

    # Folded path with a multi-step grid and a partial trailing block
    # (exercises the no-pad tail masking).
    n2 = 40
    hd2 = jax.random.normal(k_d, (n2, feature_size), dtype=jnp.float32)
    hm2 = jax.random.normal(k_m, (n2, feature_size), dtype=jnp.float32)
    out2 = jax.block_until_ready(bilinear_decoder(hd2, hm2, W, tm=32))
    ref2 = bilinear_decoder_ref(hd2, hm2, W)
    assert out2.shape == (n2,)
    assert jnp.allclose(out2, ref2, atol=1e-4, rtol=1e-4)

    # Fallback (unfolded) path: feature dim that does not divide 128, ragged
    # row count (partial trailing block, still no padding).
    f3, n3 = 24, 200
    k_w3, k_d3, k_m3 = jax.random.split(jax.random.PRNGKey(0), 3)
    W3 = jax.random.normal(k_w3, (f3, f3), dtype=jnp.float32)
    hd3 = jax.random.normal(k_d3, (n3, f3), dtype=jnp.float32)
    hm3 = jax.random.normal(k_m3, (n3, f3), dtype=jnp.float32)
    out3 = jax.block_until_ready(bilinear_decoder(hd3, hm3, W3, tm=128))
    ref3 = bilinear_decoder_ref(hd3, hm3, W3)
    assert out3.shape == (n3,)
    assert jnp.allclose(out3, ref3, atol=1e-4, rtol=1e-4)

    print("KERNEL_OK")
</pallas_src>

<mosaic_0001>
module attributes {stable_mosaic.version = 11 : i64} {
  func.func @_bilinear_kernel_folded(%arg0: i32, %arg1: memref<2x128xf32, #tpu.memory_space<vmem>>, %arg2: memref<2x128xf32, #tpu.memory_space<vmem>>, %arg3: memref<128x128xf32, #tpu.memory_space<vmem>>, %arg4: memref<128x4xf32, #tpu.memory_space<vmem>>, %arg5: memref<2x4xf32, #tpu.memory_space<vmem>>) attributes {dimension_semantics = [#tpu.dimension_semantics<parallel>], iteration_bounds = array<i64: 1>, scalar_prefetch = 0 : i64, scratch_operands = 0 : i64, tpu.core_type = #tpu.core_type<tc>, window_params = [{transform_indices = @transform_0, window_bounds = array<i64: 2, 128>}, {transform_indices = @transform_1, window_bounds = array<i64: 2, 128>}, {pipeline_mode = #tpu.pipeline_mode<synchronous>, transform_indices = @transform_2, window_bounds = array<i64: 128, 128>}, {pipeline_mode = #tpu.pipeline_mode<synchronous>, transform_indices = @transform_3, window_bounds = array<i64: 128, 4>}, {transform_indices = @transform_4, window_bounds = array<i64: 2, 4>}]} {
    %c0 = arith.constant 0 : index
    %c0_0 = arith.constant 0 : index
    %0 = vector.load %arg1[%c0, %c0_0] : memref<2x128xf32, #tpu.memory_space<vmem>>, vector<2x128xf32>
    %c0_1 = arith.constant 0 : index
    %c0_2 = arith.constant 0 : index
    %1 = vector.load %arg3[%c0_1, %c0_2] : memref<128x128xf32, #tpu.memory_space<vmem>>, vector<128x128xf32>
    %cst = arith.constant dense<0.000000e+00> : vector<2x128xf32>
    %2 = tpu.matmul %0, %1, %cst {dimension_numbers = #tpu.dot_dimension_numbers<[1], [0], [0], [1], [0, 0, 1, 1], [], []>} : vector<2x128xf32>, vector<128x128xf32>, vector<2x128xf32> -> vector<2x128xf32>
    %c0_3 = arith.constant 0 : index
    %c0_4 = arith.constant 0 : index
    %3 = vector.load %arg2[%c0_3, %c0_4] : memref<2x128xf32, #tpu.memory_space<vmem>>, vector<2x128xf32>
    %4 = arith.mulf %2, %3 : vector<2x128xf32>
    %c0_5 = arith.constant 0 : index
    %c0_6 = arith.constant 0 : index
    %5 = vector.load %arg4[%c0_5, %c0_6] : memref<128x4xf32, #tpu.memory_space<vmem>>, vector<128x4xf32>
    %cst_7 = arith.constant dense<0.000000e+00> : vector<2x4xf32>
    %6 = tpu.matmul %4, %5, %cst_7 {dimension_numbers = #tpu.dot_dimension_numbers<[1], [0], [0], [1], [0, 0, 1, 1], [], []>} : vector<2x128xf32>, vector<128x4xf32>, vector<2x4xf32> -> vector<2x4xf32>
    %7 = arith.negf %6 : vector<2x4xf32>
    %8 = math.exp %7 : vector<2x4xf32>
    %cst_8 = arith.constant 1.000000e+00 : f32
    %9 = vector.broadcast %cst_8 : f32 to vector<2x4xf32>
    %10 = arith.addf %9, %8 : vector<2x4xf32>
    %11 = arith.divf %9, %10 : vector<2x4xf32>
    %c0_9 = arith.constant 0 : index
    %c0_10 = arith.constant 0 : index
    %12 = vector.load %arg5[%c0_9, %c0_10] : memref<2x4xf32, #tpu.memory_space<vmem>>, vector<2x4xf32>
    tpu.vector_store %arg5[%c0_9, %c0_10], %11 {strides = array<i32>} : memref<2x4xf32, #tpu.memory_space<vmem>>, vector<2x4xf32>,
    return
  }
  func.func @transform_0(%arg0: i32) -> (i32, i32) {
    %c0_i32 = arith.constant 0 : i32
    %c0_i32_0 = arith.constant 0 : i32
    return %arg0, %c0_i32 : i32, i32
  }
  func.func @transform_1(%arg0: i32) -> (i32, i32) {
    %c0_i32 = arith.constant 0 : i32
    %c0_i32_0 = arith.constant 0 : i32
    return %arg0, %c0_i32 : i32, i32
  }
  func.func @transform_2(%arg0: i32) -> (i32, i32) {
    %c0_i32 = arith.constant 0 : i32
    %c0_i32_0 = arith.constant 0 : i32
    %c0_i32_1 = arith.constant 0 : i32
    return %c0_i32, %c0_i32_0 : i32, i32
  }
  func.func @transform_3(%arg0: i32) -> (i32, i32) {
    %c0_i32 = arith.constant 0 : i32
    %c0_i32_0 = arith.constant 0 : i32
    %c0_i32_1 = arith.constant 0 : i32
    return %c0_i32, %c0_i32_0 : i32, i32
  }
  func.func @transform_4(%arg0: i32) -> (i32, i32) {
    %c0_i32 = arith.constant 0 : i32
    %c0_i32_0 = arith.constant 0 : i32
    return %arg0, %c0_i32 : i32, i32
  }
}

</mosaic_0001>

<llo_original>
// kernel: tpu_custom_call.1
$region0: #{tpu_custom_call.1}
  #allocation0 [shape = 'u32[]', space=smem, size = 0x4, offset = 0x4, fixed_abs, tag = 'smem constant byte address 0x4 - core index']
  #allocation1 [shape = 'u32[72,128]{1,0:T(1,128)}', space=vmem, size = 0x9000, scoped, tag = 'internal scratch']
  %s0 = inlined_call_operand.vmem [shape: f32[2,128], index: 0, kind: input, shape index: {}]
  %s1 = inlined_call_operand.vmem [shape: f32[2,128], index: 1, kind: input, shape index: {}]
  %s2 = inlined_call_operand.vmem [shape: f32[128,128], index: 2, kind: input, shape index: {}]
  %s3 = inlined_call_operand.vmem [shape: f32[128,4], index: 3, kind: input, shape index: {}]
  %s4 = inlined_call_operand.hbm [shape: f32[2,4], index: 4, kind: output, shape index: {}]
  %s5 = sld [smem:[#allocation0]]
  $region26: #{tpu_custom_call.1} parent=0
    _
  %s7 = ssub.s32 1, %s5
  %s8 = scalar_select 0, %s7, %s5
  $region1: #{tpu_custom_call.1} parent=0
    #allocation2 [shape = 'u8[1024]{0}', space=vmem, size = 0x400, scoped, tag = 'output window, operand 0, single buffered']
    #allocation3 [shape = 's32[1]{0}', space=sflag, size = 0x4, scoped, tag = 'scoped memory for tpu_custom_call.1']
    %9 = vsyncpa [#allocation3], 0
    // Predicated region
    $region2: #{tpu_custom_call.1} parent=1 // pred_check
      _
    $region3: #{tpu_custom_call.1} parent=1 // pred_check_branch
      %11 = sbr.rel (0) target = $region5
    $region4: #{tpu_custom_call.1} parent=1 // pred_region
      _
    $region5: #{tpu_custom_call.1} parent=1 // pred_fallthru
      _
    // Predicated region
    $region6: #{tpu_custom_call.1} parent=1 // pred_check
      _
    $region7: #{tpu_custom_call.1} parent=1 // pred_check_branch
      %13 = sbr.rel (0) target = $region9
    $region8: #{tpu_custom_call.1} parent=1 // pred_region
      _
    $region9: #{tpu_custom_call.1} parent=1 // pred_fallthru
      _
    // Predicated region
    $region10: #{tpu_custom_call.1} parent=1 // pred_check
      _
    $region11: #{tpu_custom_call.1} parent=1 // pred_check_branch
      %15 = sbr.rel (0) target = $region13
    $region12: #{tpu_custom_call.1} parent=1 // pred_region
      _
    $region13: #{tpu_custom_call.1} parent=1 // pred_fallthru
      _
    // Predicated region
    $region14: #{tpu_custom_call.1} parent=1 // pred_check
      _
    $region15: #{tpu_custom_call.1} parent=1 // pred_check_branch
      %17 = sbr.rel (0) target = $region17
    $region16: #{tpu_custom_call.1} parent=1 // pred_region
      _
    $region17: #{tpu_custom_call.1} parent=1 // pred_fallthru
      _
    %v18 = vld [vmem:[%s0] sm:$0x3]
    %v19 = vld [vmem:[%s2] sm:$0xff]
    %v20 = vld [vmem:[%s2 + $0x8] sm:$0xff]
    %v21 = vld [vmem:[%s2 + $0x10] sm:$0xff]
    %v22 = vld [vmem:[%s2 + $0x18] sm:$0xff]
    %v23 = vld [vmem:[%s2 + $0x20] sm:$0xff]
    %v24 = vld [vmem:[%s2 + $0x28] sm:$0xff]
    %v25 = vld [vmem:[%s2 + $0x30] sm:$0xff]
    %v26 = vld [vmem:[%s2 + $0x38] sm:$0xff]
    %v27 = vld [vmem:[%s2 + $0x40] sm:$0xff]
    %v28 = vld [vmem:[%s2 + $0x48] sm:$0xff]
    %v29 = vld [vmem:[%s2 + $0x50] sm:$0xff]
    %v30 = vld [vmem:[%s2 + $0x58] sm:$0xff]
    %v31 = vld [vmem:[%s2 + $0x60] sm:$0xff]
    %v32 = vld [vmem:[%s2 + $0x68] sm:$0xff]
    %v33 = vld [vmem:[%s2 + $0x70] sm:$0xff]
    %v34 = vld [vmem:[%s2 + $0x78] sm:$0xff]
    %35 = vmatpush.msra.mxu0 %v34
    %36 = vmatpush.msra.mxu0 %v33
    %37 = vmatpush.msra.mxu0 %v32
    %38 = vmatpush.msra.mxu0 %v31
    %39 = vmatpush.msra.mxu0 %v30
    %40 = vmatpush.msra.mxu0 %v29
    %41 = vmatpush.msra.mxu0 %v28
    %42 = vmatpush.msra.mxu0 %v27
    %43 = vmatpush.msra.mxu0 %v26
    %44 = vmatpush.msra.mxu0 %v25
    %45 = vmatpush.msra.mxu0 %v24
    %46 = vmatpush.msra.mxu0 %v23
    %47 = vmatpush.msra.mxu0 %v22
    %48 = vmatpush.msra.mxu0 %v21
    %49 = vmatpush.msra.mxu0 %v20
    %50 = vmatpush.msra.mxu0 %v19
    %51 = vmatmul.f32.gmra.mxu0 %v18
    %v52 = vpop.f32.mrf.mxu0
    %v53 = vadd.f32 0.0, %v52
    %54 = vdwg.mxu0
    %v55 = vld [vmem:[%s1] sm:$0x3]
    %v56 = vmul.f32 %v53, %v55
    %v57 = vld [vmem:[%s3] sm:$0xff]
    %v58 = vld [vmem:[%s3 + $0x8] sm:$0xff]
    %v59 = vld [vmem:[%s3 + $0x10] sm:$0xff]
    %v60 = vld [vmem:[%s3 + $0x18] sm:$0xff]
    %v61 = vld [vmem:[%s3 + $0x20] sm:$0xff]
    %v62 = vld [vmem:[%s3 + $0x28] sm:$0xff]
    %v63 = vld [vmem:[%s3 + $0x30] sm:$0xff]
    %v64 = vld [vmem:[%s3 + $0x38] sm:$0xff]
    %v65 = vld [vmem:[%s3 + $0x40] sm:$0xff]
    %v66 = vld [vmem:[%s3 + $0x48] sm:$0xff]
    %v67 = vld [vmem:[%s3 + $0x50] sm:$0xff]
    %v68 = vld [vmem:[%s3 + $0x58] sm:$0xff]
    %v69 = vld [vmem:[%s3 + $0x60] sm:$0xff]
    %v70 = vld [vmem:[%s3 + $0x68] sm:$0xff]
    %v71 = vld [vmem:[%s3 + $0x70] sm:$0xff]
    %v72 = vld [vmem:[%s3 + $0x78] sm:$0xff]
    %73 = vmatpush.msra.mxu0 %v72
    %74 = vmatpush.msra.mxu0 %v71
    %75 = vmatpush.msra.mxu0 %v70
    %76 = vmatpush.msra.mxu0 %v69
    %77 = vmatpush.msra.mxu0 %v68
    %78 = vmatpush.msra.mxu0 %v67
    %79 = vmatpush.msra.mxu0 %v66
    %80 = vmatpush.msra.mxu0 %v65
    %81 = vmatpush.msra.mxu0 %v64
    %82 = vmatpush.msra.mxu0 %v63
    %83 = vmatpush.msra.mxu0 %v62
    %84 = vmatpush.msra.mxu0 %v61
    %85 = vmatpush.msra.mxu0 %v60
    %86 = vmatpush.msra.mxu0 %v59
    %87 = vmatpush.msra.mxu0 %v58
    %88 = vmatpush.msra.mxu0 %v57
    %89 = vmatmul.f32.gmra.mxu0 %v56
    %v90 = vpop.f32.mrf.mxu0
    %v91 = vadd.f32 0.0, %v90
    %92 = vdwg.mxu0
    %v93 = vxor.u32 %v91, 2147483648
    %v94 = vmul.f32 %v93, 1.442695
    %v95 = vpow.pop %v94
    %v96 = vadd.f32 %v95, 1.0
    %v97 = vrcp.pop %v96
    %v98 = vmul.f32 %v96, %v97
    %v99 = vsub.f32 1.0, %v98
    %v100 = vmul.f32 %v97, %v99
    %v101 = vadd.f32 %v97, %v100
    %vm102 = vweird.f32 %v96
    %vm103 = vweird.f32 %v97
    %vm104 = vmor %vm102, %vm103
    %v105 = vsel %vm104, %v97, %v101
    %v106 = vand.u32 2147483647, %v96
    %vm107 = vcmp.eq.f32.partialorder %v106, 8.507059e+37
    %v108 = vand.u32 %v96, 2147483648
    %v109 = vor.u32 1.1754944e-38, %v108
    %v110 = vsel %vm107, %v109, %v105
    %v111 = vmul.f32 1.0, %v110
    %vm112 = vcmask 25600
    %113 = vst.msk [vmem:[#allocation2] sm:$0x3] %vm112, %v111
    // Predicated region
    $region18: #{tpu_custom_call.1} parent=1 // pred_check
      _
    $region19: #{tpu_custom_call.1} parent=1 // pred_check_branch
      %115 = sbr.rel (0) target = $region21
    $region20: #{tpu_custom_call.1} parent=1 // pred_region
      %117 = vsyncadd [#allocation3], 0
      %s119 = sshll.u32 [#allocation2], 4
      %s120 = int_to_ptr.vmem [resolvable:$true] %s119
      %s121 = sshll.u32 %s4, 4
      %s122 = int_to_ptr.hbm [resolvable:$true] %s121
      %124 = dma.vmem_to_hbm [thread:$0]  %s120, 32, %s122, [#allocation3]
    $region21: #{tpu_custom_call.1} parent=1 // pred_fallthru
      _
    // Predicated region
    $region22: #{tpu_custom_call.1} parent=1 // pred_check
      _
    $region23: #{tpu_custom_call.1} parent=1 // pred_check_branch
      %126 = sbr.rel (0) target = $region25
    $region24: #{tpu_custom_call.1} parent=1 // pred_region
      %128 = dma.done [#allocation3], 32
    $region25: #{tpu_custom_call.1} parent=1 // pred_fallthru
      _
    %129 = vsyncpa [#allocation3], 1

</llo_original>
